<compile_context>
chip_gen: v7x
topology: tpu7x:2x2x1
jax: 0.10.0
libtpu: 0.0.40
codegen_flags: <defaults>
</compile_context>

<pallas_src>
import functools

import jax
import jax.numpy as jnp
import numpy as np
from jax.experimental import pallas as pl
from jax.experimental.pallas import tpu as pltpu

# -------- small configuration consistent with the module --------
BATCH = 2           # N
IMG = 16            # input spatial size
PATCH = 8           # ViT patch size -> (16/8)^2 = 4 patches + CLS = 5 tokens
WIDTH = 32          # transformer width == backbone[1]
N_HOOKS = 4         # number of transformer blocks == number of ln_2 hooks
NPROJ = 2           # nproj
PROJ_DIM = 32       # proj_dim
P_PAD = 128         # proj_dim zero-padded to a full lane tile

VMEM_LIMIT_BYTES = 48 * 1024 * 1024   # explicit scoped-VMEM limit (ok on v5e/v6e/v7x)
TILE_BUDGET_BYTES = 36 * 1024 * 1024  # budget used to derive the batch tile


def _round_up(v, m):
    return (v + m - 1) // m * m


# ======================================================================
# Pallas kernel: batched proj1 -> softmax(alpha)*hook sum -> proj2 -> head.
# One grid step processes one batch tile; everything stays resident in VMEM.
# ======================================================================
def _rine_head_kernel(g_ref, w10_ref, wstk_ref, bstk_ref, wmix_ref, out_ref,
                      *, pred_lane):
    n_hooks, tile_n, d = g_ref.shape           # g block: [H, tile_n, D] (bf16)
    p = out_ref.shape[1]                       # 128 (padded proj_dim)
    cdt = g_ref.dtype                          # matmul operand dtype (bf16)

    # ---- proj1: ONE batched (hooks x batch-tile) MXU dot per layer ---------
    # [H, T, D] -> [H*T, D] is a pure tile-stacking collapse (T % 16 == 0,
    # D stays lane-major), so no relayout is required.
    x = g_ref[...].reshape(n_hooks * tile_n, d)
    x = jnp.dot(x, w10_ref[...], preferred_element_type=jnp.float32)
    x = jnp.maximum(x + bstk_ref[0:1, :], 0.0)                         # f32 VPU
    x = jnp.dot(x.astype(cdt), wstk_ref[0], preferred_element_type=jnp.float32)
    x = jnp.maximum(x + bstk_ref[1:2, :], 0.0)                         # [H*T, 128]

    # ---- softmax(alpha)-weighted sum over hooks (exact f32 VPU FMAs) -------
    wmix = wmix_ref[...]                                               # [H, 128]
    z = jnp.zeros((tile_n, p), jnp.float32)
    for h in range(n_hooks):                                           # tiny static unroll
        z = z + wmix[h:h + 1, :] * x[h * tile_n:(h + 1) * tile_n, :]

    # ---- proj2 ----
    z = jnp.maximum(jnp.dot(z.astype(cdt), wstk_ref[1],
                            preferred_element_type=jnp.float32) + bstk_ref[2:3, :], 0.0)
    z = jnp.maximum(jnp.dot(z.astype(cdt), wstk_ref[2],
                            preferred_element_type=jnp.float32) + bstk_ref[3:4, :], 0.0)

    # ---- head: Linear-ReLU, Linear-ReLU, Linear(->1) ----
    y = jnp.maximum(jnp.dot(z.astype(cdt), wstk_ref[3],
                            preferred_element_type=jnp.float32) + bstk_ref[4:5, :], 0.0)
    y = jnp.maximum(jnp.dot(y.astype(cdt), wstk_ref[4],
                            preferred_element_type=jnp.float32) + bstk_ref[5:6, :], 0.0)

    # Final [P]->1 projection as a VPU multiply + lane reduce; padded lanes of
    # y and of the packed wh2 row are exactly zero so the reduce is exact.
    wh2t = bstk_ref[6:7, :]
    bh2_row = bstk_ref[7:8, :]
    pred = jnp.sum(y * wh2t, axis=-1, keepdims=True) + bh2_row[:, 0:1]  # [T, 1]

    # ---- single unmasked lane-dense [tile_n, 128] store --------------------
    # z's padded lanes (>= PROJ_DIM) are exactly zero, so injecting pred into
    # lane `pred_lane` only overwrites a zero lane; no concatenate needed.
    lane = jax.lax.broadcasted_iota(jnp.int32, (tile_n, p), 1)
    out_ref[...] = jnp.where(lane == pred_lane, pred, z)


def _pick_tile_n(n, n_hooks, d):
    """Largest 16-aligned batch tile that fits the VMEM budget (double-
    buffered bf16 g block + out slab + f32 intermediates), preferring >=2
    grid steps when the batch allows so megacore engages on v7x."""
    def step_bytes(t):
        g_blk = n_hooks * t * d * 2                  # bf16 g tile, one buffer
        out = t * P_PAD * 4                          # f32 output slab
        x_f32 = n_hooks * t * P_PAD * 4              # proj1 intermediate
        zy = 4 * t * P_PAD * 4                       # z / y temporaries
        return 2 * (g_blk + out) + x_f32 + zy        # 2x: double buffering

    t = _round_up(min(256, max(n, 16)), 16)
    while t > 16 and step_bytes(t) > TILE_BUDGET_BYTES:
        t -= 16
    if _round_up(n, t) // t < 2 and t > 16 and n > 16:
        t = _round_up(max(16, t // 2), 16)           # >=2 steps -> both v7x TCs
    return t


def rine_head_pallas(g_hnd, head, *, compute_dtype=jnp.bfloat16):
    """g_hnd: [H, N, D] stacked ln_2 CLS features (hook-major, D lane-major),
    already in the matmul compute dtype (bf16) straight from the backbone."""
    n_hooks, n, d = g_hnd.shape
    p_real = head["w1"][0].shape[1]
    pred_lane = p_real                       # prediction goes in first padded z lane

    cdt = compute_dtype
    if g_hnd.dtype != cdt:                   # normally already bf16 (cast fused upstream)
        g_hnd = g_hnd.astype(cdt)

    tile_n = _pick_tile_n(n, n_hooks, d)
    n_pad = _round_up(n, tile_n)
    if n_pad != n:
        g_hnd = jnp.pad(g_hnd, ((0, 0), (0, n_pad - n), (0, 0)))

    # ---- zero-pad proj_dim to 128 lanes and pack the tiny params -----------
    # Zero weight columns/rows + zero biases stay exactly zero through ReLU,
    # so padded lanes never perturb the real lanes.
    def pad2(a, rows, cols):
        return jnp.pad(a, ((0, rows - a.shape[0]), (0, cols - a.shape[1])))

    # softmax(alpha) over the hooks axis, computed ONCE outside the grid.
    wmix = jax.nn.softmax(head["alpha"].astype(jnp.float32), axis=1)[0]    # [H, P]
    wmix = pad2(wmix, n_hooks, P_PAD)                                      # [H, 128]

    w10 = pad2(head["w1"][0], d, P_PAD).astype(cdt)                        # [D, 128]
    wstk = jnp.stack([pad2(w, P_PAD, P_PAD) for w in
                      (head["w1"][1], head["w2"][0], head["w2"][1],
                       head["wh"][0], head["wh"][1])]).astype(cdt)         # [5,128,128]
    bstk = jnp.concatenate([
        pad2(head["b1"][0], 1, P_PAD), pad2(head["b1"][1], 1, P_PAD),
        pad2(head["b2"][0], 1, P_PAD), pad2(head["b2"][1], 1, P_PAD),
        pad2(head["bh"][0], 1, P_PAD), pad2(head["bh"][1], 1, P_PAD),
        pad2(head["wh"][2].reshape(1, p_real), 1, P_PAD),                  # wh2^T row
        jnp.broadcast_to(head["bh"][2].reshape(1, 1), (1, P_PAD)),         # bh2 row
    ], axis=0).astype(jnp.float32)                                         # [8, 128]

    rep2 = lambda i: (0, 0)
    rep3 = lambda i: (0, 0, 0)
    grid = (n_pad // tile_n,)

    flops = 2 * n_pad * (n_hooks * d * p_real + n_hooks * p_real * p_real
                         + 4 * p_real * p_real + p_real)
    bytes_accessed = (g_hnd.size * 2 + w10.size * 2 + wstk.size * 2
                      + bstk.size * 4 + wmix.size * 4 + n_pad * P_PAD * 4)

    slab = pl.pallas_call(
        functools.partial(_rine_head_kernel, pred_lane=pred_lane),
        out_shape=jax.ShapeDtypeStruct((n_pad, P_PAD), jnp.float32),
        grid_spec=pltpu.PrefetchScalarGridSpec(
            num_scalar_prefetch=0,
            grid=grid,
            in_specs=[
                pl.BlockSpec((n_hooks, tile_n, d), lambda i: (0, i, 0)),   # g tile
                pl.BlockSpec((d, P_PAD), rep2),                            # w1[0]
                pl.BlockSpec((5, P_PAD, P_PAD), rep3),                     # square weights
                pl.BlockSpec((8, P_PAD), rep2),                            # biases + wh2t + bh2
                pl.BlockSpec((n_hooks, P_PAD), rep2),                      # softmax(alpha)
            ],
            out_specs=pl.BlockSpec((tile_n, P_PAD), lambda i: (i, 0)),
        ),
        compiler_params=pltpu.CompilerParams(
            dimension_semantics=("parallel",),
            vmem_limit_bytes=VMEM_LIMIT_BYTES),
        cost_estimate=pl.CostEstimate(
            flops=flops, transcendentals=0, bytes_accessed=bytes_accessed),
    )(g_hnd, w10, wstk, bstk, wmix)

    p = slab[:n, pred_lane:pred_lane + 1]    # [N, 1]
    z = slab[:n, :p_real]                    # [N, P]
    return p, z


# ======================================================================
# Frozen CLIP visual backbone: deterministic synthetic stand-in (plain JAX).
# TODO(synk): the real clip.load(backbone) weights/arch cannot be loaded; this
# stub reproduces the ln_2-hook semantics (collect ln_2 outputs, take the CLS
# token), emitting them hook-major [H, N, D] already in bf16 so no extra
# wrapper-side HBM cast pass is needed.
# ======================================================================
def _layer_norm(x, g, b, eps=1e-5):
    mu = jnp.mean(x, axis=-1, keepdims=True)
    var = jnp.mean((x - mu) ** 2, axis=-1, keepdims=True)
    return (x - mu) * jax.lax.rsqrt(var + eps) * g + b


def clip_visual_stub(x, params, feat_dtype=jnp.bfloat16):
    """x: [N, 3, IMG, IMG] NCHW. Returns g: [H, N, D] stacked ln_2 CLS feats (bf16)."""
    n = x.shape[0]
    # patch-embedding conv (kernel=stride=PATCH, no bias) via reshape + matmul
    xp = x.reshape(n, 3, IMG // PATCH, PATCH, IMG // PATCH, PATCH)
    xp = xp.transpose(0, 2, 4, 1, 3, 5).reshape(n, (IMG // PATCH) ** 2,
                                                3 * PATCH * PATCH)
    tok = xp @ params["patch_w"]                                   # [N, L-1, D]
    cls = jnp.broadcast_to(params["cls"], (n, 1, WIDTH))
    tok = jnp.concatenate([cls, tok], axis=1) + params["pos"]      # [N, L, D]
    tok = _layer_norm(tok, params["ln_pre_g"], params["ln_pre_b"])
    h = tok.transpose(1, 0, 2)                                     # [L, N, D] (LND)

    cls_feats = []
    for blk in params["blocks"]:
        a_in = _layer_norm(h, blk["ln1_g"], blk["ln1_b"])
        q = a_in @ blk["wq"]
        k = a_in @ blk["wk"]
        v = a_in @ blk["wv"]
        att = jnp.einsum("lnd,mnd->nlm", q, k) / jnp.sqrt(WIDTH)
        att = jax.nn.softmax(att, axis=-1)
        o = jnp.einsum("nlm,mnd->lnd", att, v) @ blk["wo"]
        h = h + o
        ln2 = _layer_norm(h, blk["ln2_g"], blk["ln2_b"])           # <- hooked output
        cls_feats.append(ln2[0].astype(feat_dtype))                # CLS token: [N, D] bf16
        m = ln2 @ blk["w_fc"] + blk["b_fc"]
        m = m * jax.nn.sigmoid(1.702 * m)                          # QuickGELU
        h = h + m @ blk["w_proj"] + blk["b_proj"]

    # equivalent data to torch.stack([h.output], dim=2)[0], stored hook-major
    return jnp.stack(cls_feats, axis=0)                            # [H, N, D] bf16


# ======================================================================
# Deterministic parameter init
# ======================================================================
def _init_all(key):
    ks = iter(jax.random.split(key, 256))

    def nrm(shape, scale=0.02):
        return scale * jax.random.normal(next(ks), shape, jnp.float32)

    clip = {
        "patch_w": nrm((3 * PATCH * PATCH, WIDTH)),
        "cls": nrm((WIDTH,)),
        "pos": nrm(((IMG // PATCH) ** 2 + 1, WIDTH)),
        "ln_pre_g": jnp.ones((WIDTH,), jnp.float32),
        "ln_pre_b": jnp.zeros((WIDTH,), jnp.float32),
        "blocks": [],
    }
    for _ in range(N_HOOKS):
        clip["blocks"].append({
            "ln1_g": jnp.ones((WIDTH,), jnp.float32),
            "ln1_b": jnp.zeros((WIDTH,), jnp.float32),
            "wq": nrm((WIDTH, WIDTH)), "wk": nrm((WIDTH, WIDTH)),
            "wv": nrm((WIDTH, WIDTH)), "wo": nrm((WIDTH, WIDTH)),
            "ln2_g": jnp.ones((WIDTH,), jnp.float32),
            "ln2_b": jnp.zeros((WIDTH,), jnp.float32),
            "w_fc": nrm((WIDTH, 4 * WIDTH)),
            "b_fc": jnp.zeros((4 * WIDTH,), jnp.float32),
            "w_proj": nrm((4 * WIDTH, WIDTH)),
            "b_proj": jnp.zeros((WIDTH,), jnp.float32),
        })

    # RineModel's own parameters (weights stored as [in, out]; biases as [1, out])
    head = {
        "alpha": jax.random.normal(next(ks), (1, N_HOOKS, PROJ_DIM), jnp.float32),
        "w1": [nrm((WIDTH if i == 0 else PROJ_DIM, PROJ_DIM), 0.05)
               for i in range(NPROJ)],
        "b1": [nrm((1, PROJ_DIM), 0.05) for _ in range(NPROJ)],
        "w2": [nrm((PROJ_DIM, PROJ_DIM), 0.05) for _ in range(NPROJ)],
        "b2": [nrm((1, PROJ_DIM), 0.05) for _ in range(NPROJ)],
        "wh": [nrm((PROJ_DIM, PROJ_DIM), 0.05),
               nrm((PROJ_DIM, PROJ_DIM), 0.05),
               nrm((PROJ_DIM, 1), 0.05)],
        "bh": [nrm((1, PROJ_DIM), 0.05),
               nrm((1, PROJ_DIM), 0.05),
               nrm((1, 1), 0.05)],
    }
    return clip, head


# plain-JAX reference of the learnable part (same bf16-MXU / f32-accumulate
# matmul semantics as the kernel; element-wise math stays f32).
def rine_head_ref(g_hnd, head, compute_dtype=jnp.bfloat16):
    def mm(x, w):
        return jnp.dot(x.astype(compute_dtype), w.astype(compute_dtype),
                       preferred_element_type=jnp.float32)

    a = jax.nn.softmax(head["alpha"].astype(jnp.float32), axis=1)[0]   # [H, P]
    n_hooks, n, d = g_hnd.shape
    x = g_hnd.astype(jnp.float32).reshape(n_hooks * n, d)
    for i in range(NPROJ):                                             # proj1 (+Dropout=id)
        x = jnp.maximum(mm(x, head["w1"][i]) + head["b1"][i], 0.0)
    x = x.reshape(n_hooks, n, -1)
    z = jnp.sum(a[:, None, :] * x, axis=0)                             # [N, P]
    for i in range(NPROJ):                                             # proj2
        z = jnp.maximum(mm(z, head["w2"][i]) + head["b2"][i], 0.0)
    y = jnp.maximum(mm(z, head["wh"][0]) + head["bh"][0], 0.0)
    y = jnp.maximum(mm(y, head["wh"][1]) + head["bh"][1], 0.0)
    p = jnp.sum(y * head["wh"][2].astype(jnp.float32).T,
                axis=-1, keepdims=True) + head["bh"][2]
    return p, z


if __name__ == "__main__":
    key = jax.random.PRNGKey(0)
    kp, kx = jax.random.split(key)
    clip_params, head_params = _init_all(kp)

    # example image batch, NCHW like the PyTorch module
    x = jax.random.normal(kx, (BATCH, 3, IMG, IMG), jnp.float32)

    # frozen backbone feature extraction (no_grad in the reference); emits bf16
    g_hnd = clip_visual_stub(x, clip_params)             # [H, N, D], hook-major

    p, z = rine_head_pallas(g_hnd, head_params)
    jax.block_until_ready((p, z))

    p_ref, z_ref = rine_head_ref(g_hnd, head_params)
    np.testing.assert_allclose(np.asarray(p), np.asarray(p_ref), rtol=5e-3, atol=1e-3)
    np.testing.assert_allclose(np.asarray(z), np.asarray(z_ref), rtol=5e-3, atol=1e-3)

    print("KERNEL_OK")
</pallas_src>

<mosaic_0001>
module attributes {stable_mosaic.version = 11 : i64} {
  func.func @_rine_head_kernel(%arg0: i32, %arg1: memref<4x16x32xbf16, #tpu.memory_space<vmem>>, %arg2: memref<32x128xbf16, #tpu.memory_space<vmem>>, %arg3: memref<5x128x128xbf16, #tpu.memory_space<vmem>>, %arg4: memref<8x128xf32, #tpu.memory_space<vmem>>, %arg5: memref<4x128xf32, #tpu.memory_space<vmem>>, %arg6: memref<16x128xf32, #tpu.memory_space<vmem>>) attributes {dimension_semantics = [#tpu.dimension_semantics<parallel>], iteration_bounds = array<i64: 1>, scalar_prefetch = 0 : i64, scratch_operands = 0 : i64, tpu.core_type = #tpu.core_type<tc>, window_params = [{transform_indices = @transform_0, window_bounds = array<i64: 4, 16, 32>}, {pipeline_mode = #tpu.pipeline_mode<synchronous>, transform_indices = @transform_1, window_bounds = array<i64: 32, 128>}, {pipeline_mode = #tpu.pipeline_mode<synchronous>, transform_indices = @transform_2, window_bounds = array<i64: 5, 128, 128>}, {pipeline_mode = #tpu.pipeline_mode<synchronous>, transform_indices = @transform_3, window_bounds = array<i64: 8, 128>}, {pipeline_mode = #tpu.pipeline_mode<synchronous>, transform_indices = @transform_4, window_bounds = array<i64: 4, 128>}, {transform_indices = @transform_5, window_bounds = array<i64: 16, 128>}]} {
    %c0 = arith.constant 0 : index
    %c0_0 = arith.constant 0 : index
    %c0_1 = arith.constant 0 : index
    %0 = vector.load %arg1[%c0, %c0_0, %c0_1] : memref<4x16x32xbf16, #tpu.memory_space<vmem>>, vector<4x16x32xbf16>
    %1 = vector.shape_cast %0 : vector<4x16x32xbf16> to vector<64x32xbf16>
    %c0_2 = arith.constant 0 : index
    %c0_3 = arith.constant 0 : index
    %2 = vector.load %arg2[%c0_2, %c0_3] : memref<32x128xbf16, #tpu.memory_space<vmem>>, vector<32x128xbf16>
    %cst = arith.constant dense<0.000000e+00> : vector<64x128xf32>
    %3 = tpu.matmul %1, %2, %cst {dimension_numbers = #tpu.dot_dimension_numbers<[1], [0], [0], [1], [0, 0, 1, 1], [], []>} : vector<64x32xbf16>, vector<32x128xbf16>, vector<64x128xf32> -> vector<64x128xf32>
    %c0_4 = arith.constant 0 : index
    %c0_5 = arith.constant 0 : index
    %4 = vector.load %arg4[%c0_4, %c0_5] : memref<8x128xf32, #tpu.memory_space<vmem>>, vector<1x128xf32>
    %5 = vector.broadcast %4 : vector<1x128xf32> to vector<64x128xf32>
    %6 = arith.addf %3, %5 : vector<64x128xf32>
    %cst_6 = arith.constant 0.000000e+00 : f32
    %7 = vector.broadcast %cst_6 : f32 to vector<64x128xf32>
    %8 = arith.maximumf %6, %7 : vector<64x128xf32>
    %9 = arith.truncf %8 : vector<64x128xf32> to vector<64x128xbf16>
    %c0_7 = arith.constant 0 : index
    %c0_8 = arith.constant 0 : index
    %c0_9 = arith.constant 0 : index
    %10 = vector.load %arg3[%c0_7, %c0_8, %c0_9] : memref<5x128x128xbf16, #tpu.memory_space<vmem>>, vector<1x128x128xbf16>
    %11 = vector.shape_cast %10 : vector<1x128x128xbf16> to vector<128x128xbf16>
    %cst_10 = arith.constant dense<0.000000e+00> : vector<64x128xf32>
    %12 = tpu.matmul %9, %11, %cst_10 {dimension_numbers = #tpu.dot_dimension_numbers<[1], [0], [0], [1], [0, 0, 1, 1], [], []>} : vector<64x128xbf16>, vector<128x128xbf16>, vector<64x128xf32> -> vector<64x128xf32>
    %c1 = arith.constant 1 : index
    %c0_11 = arith.constant 0 : index
    %13 = vector.load %arg4[%c1, %c0_11] : memref<8x128xf32, #tpu.memory_space<vmem>>, vector<1x128xf32>
    %14 = vector.broadcast %13 : vector<1x128xf32> to vector<64x128xf32>
    %15 = arith.addf %12, %14 : vector<64x128xf32>
    %cst_12 = arith.constant 0.000000e+00 : f32
    %16 = vector.broadcast %cst_12 : f32 to vector<64x128xf32>
    %17 = arith.maximumf %15, %16 : vector<64x128xf32>
    %c0_13 = arith.constant 0 : index
    %c0_14 = arith.constant 0 : index
    %18 = vector.load %arg5[%c0_13, %c0_14] : memref<4x128xf32, #tpu.memory_space<vmem>>, vector<4x128xf32>
    %cst_15 = arith.constant 0.000000e+00 : f32
    %19 = vector.broadcast %cst_15 : f32 to vector<16x128xf32>
    %20 = vector.extract_strided_slice %18 {offsets = [0, 0], sizes = [1, 128], strides = [1, 1]} : vector<4x128xf32> to vector<1x128xf32>
    %21 = vector.extract_strided_slice %17 {offsets = [0, 0], sizes = [16, 128], strides = [1, 1]} : vector<64x128xf32> to vector<16x128xf32>
    %22 = vector.broadcast %20 : vector<1x128xf32> to vector<16x128xf32>
    %23 = arith.mulf %22, %21 : vector<16x128xf32>
    %24 = arith.addf %19, %23 : vector<16x128xf32>
    %25 = vector.extract_strided_slice %18 {offsets = [1, 0], sizes = [1, 128], strides = [1, 1]} : vector<4x128xf32> to vector<1x128xf32>
    %26 = vector.extract_strided_slice %17 {offsets = [16, 0], sizes = [16, 128], strides = [1, 1]} : vector<64x128xf32> to vector<16x128xf32>
    %27 = vector.broadcast %25 : vector<1x128xf32> to vector<16x128xf32>
    %28 = arith.mulf %27, %26 : vector<16x128xf32>
    %29 = arith.addf %24, %28 : vector<16x128xf32>
    %30 = vector.extract_strided_slice %18 {offsets = [2, 0], sizes = [1, 128], strides = [1, 1]} : vector<4x128xf32> to vector<1x128xf32>
    %31 = vector.extract_strided_slice %17 {offsets = [32, 0], sizes = [16, 128], strides = [1, 1]} : vector<64x128xf32> to vector<16x128xf32>
    %32 = vector.broadcast %30 : vector<1x128xf32> to vector<16x128xf32>
    %33 = arith.mulf %32, %31 : vector<16x128xf32>
    %34 = arith.addf %29, %33 : vector<16x128xf32>
    %35 = vector.extract_strided_slice %18 {offsets = [3, 0], sizes = [1, 128], strides = [1, 1]} : vector<4x128xf32> to vector<1x128xf32>
    %36 = vector.extract_strided_slice %17 {offsets = [48, 0], sizes = [16, 128], strides = [1, 1]} : vector<64x128xf32> to vector<16x128xf32>
    %37 = vector.broadcast %35 : vector<1x128xf32> to vector<16x128xf32>
    %38 = arith.mulf %37, %36 : vector<16x128xf32>
    %39 = arith.addf %34, %38 : vector<16x128xf32>
    %40 = arith.truncf %39 : vector<16x128xf32> to vector<16x128xbf16>
    %c1_16 = arith.constant 1 : index
    %c0_17 = arith.constant 0 : index
    %c0_18 = arith.constant 0 : index
    %41 = vector.load %arg3[%c1_16, %c0_17, %c0_18] : memref<5x128x128xbf16, #tpu.memory_space<vmem>>, vector<1x128x128xbf16>
    %42 = vector.shape_cast %41 : vector<1x128x128xbf16> to vector<128x128xbf16>
    %cst_19 = arith.constant dense<0.000000e+00> : vector<16x128xf32>
    %43 = tpu.matmul %40, %42, %cst_19 {dimension_numbers = #tpu.dot_dimension_numbers<[1], [0], [0], [1], [0, 0, 1, 1], [], []>} : vector<16x128xbf16>, vector<128x128xbf16>, vector<16x128xf32> -> vector<16x128xf32>
    %c2 = arith.constant 2 : index
    %c0_20 = arith.constant 0 : index
    %44 = vector.load %arg4[%c2, %c0_20] : memref<8x128xf32, #tpu.memory_space<vmem>>, vector<1x128xf32>
    %45 = vector.broadcast %44 : vector<1x128xf32> to vector<16x128xf32>
    %46 = arith.addf %43, %45 : vector<16x128xf32>
    %cst_21 = arith.constant 0.000000e+00 : f32
    %47 = vector.broadcast %cst_21 : f32 to vector<16x128xf32>
    %48 = arith.maximumf %46, %47 : vector<16x128xf32>
    %49 = arith.truncf %48 : vector<16x128xf32> to vector<16x128xbf16>
    %c2_22 = arith.constant 2 : index
    %c0_23 = arith.constant 0 : index
    %c0_24 = arith.constant 0 : index
    %50 = vector.load %arg3[%c2_22, %c0_23, %c0_24] : memref<5x128x128xbf16, #tpu.memory_space<vmem>>, vector<1x128x128xbf16>
    %51 = vector.shape_cast %50 : vector<1x128x128xbf16> to vector<128x128xbf16>
    %cst_25 = arith.constant dense<0.000000e+00> : vector<16x128xf32>
    %52 = tpu.matmul %49, %51, %cst_25 {dimension_numbers = #tpu.dot_dimension_numbers<[1], [0], [0], [1], [0, 0, 1, 1], [], []>} : vector<16x128xbf16>, vector<128x128xbf16>, vector<16x128xf32> -> vector<16x128xf32>
    %c3 = arith.constant 3 : index
    %c0_26 = arith.constant 0 : index
    %53 = vector.load %arg4[%c3, %c0_26] : memref<8x128xf32, #tpu.memory_space<vmem>>, vector<1x128xf32>
    %54 = vector.broadcast %53 : vector<1x128xf32> to vector<16x128xf32>
    %55 = arith.addf %52, %54 : vector<16x128xf32>
    %cst_27 = arith.constant 0.000000e+00 : f32
    %56 = vector.broadcast %cst_27 : f32 to vector<16x128xf32>
    %57 = arith.maximumf %55, %56 : vector<16x128xf32>
    %58 = arith.truncf %57 : vector<16x128xf32> to vector<16x128xbf16>
    %c3_28 = arith.constant 3 : index
    %c0_29 = arith.constant 0 : index
    %c0_30 = arith.constant 0 : index
    %59 = vector.load %arg3[%c3_28, %c0_29, %c0_30] : memref<5x128x128xbf16, #tpu.memory_space<vmem>>, vector<1x128x128xbf16>
    %60 = vector.shape_cast %59 : vector<1x128x128xbf16> to vector<128x128xbf16>
    %cst_31 = arith.constant dense<0.000000e+00> : vector<16x128xf32>
    %61 = tpu.matmul %58, %60, %cst_31 {dimension_numbers = #tpu.dot_dimension_numbers<[1], [0], [0], [1], [0, 0, 1, 1], [], []>} : vector<16x128xbf16>, vector<128x128xbf16>, vector<16x128xf32> -> vector<16x128xf32>
    %c4 = arith.constant 4 : index
    %c0_32 = arith.constant 0 : index
    %62 = vector.load %arg4[%c4, %c0_32] : memref<8x128xf32, #tpu.memory_space<vmem>>, vector<1x128xf32>
    %63 = vector.broadcast %62 : vector<1x128xf32> to vector<16x128xf32>
    %64 = arith.addf %61, %63 : vector<16x128xf32>
    %cst_33 = arith.constant 0.000000e+00 : f32
    %65 = vector.broadcast %cst_33 : f32 to vector<16x128xf32>
    %66 = arith.maximumf %64, %65 : vector<16x128xf32>
    %67 = arith.truncf %66 : vector<16x128xf32> to vector<16x128xbf16>
    %c4_34 = arith.constant 4 : index
    %c0_35 = arith.constant 0 : index
    %c0_36 = arith.constant 0 : index
    %68 = vector.load %arg3[%c4_34, %c0_35, %c0_36] : memref<5x128x128xbf16, #tpu.memory_space<vmem>>, vector<1x128x128xbf16>
    %69 = vector.shape_cast %68 : vector<1x128x128xbf16> to vector<128x128xbf16>
    %cst_37 = arith.constant dense<0.000000e+00> : vector<16x128xf32>
    %70 = tpu.matmul %67, %69, %cst_37 {dimension_numbers = #tpu.dot_dimension_numbers<[1], [0], [0], [1], [0, 0, 1, 1], [], []>} : vector<16x128xbf16>, vector<128x128xbf16>, vector<16x128xf32> -> vector<16x128xf32>
    %c5 = arith.constant 5 : index
    %c0_38 = arith.constant 0 : index
    %71 = vector.load %arg4[%c5, %c0_38] : memref<8x128xf32, #tpu.memory_space<vmem>>, vector<1x128xf32>
    %72 = vector.broadcast %71 : vector<1x128xf32> to vector<16x128xf32>
    %73 = arith.addf %70, %72 : vector<16x128xf32>
    %cst_39 = arith.constant 0.000000e+00 : f32
    %74 = vector.broadcast %cst_39 : f32 to vector<16x128xf32>
    %75 = arith.maximumf %73, %74 : vector<16x128xf32>
    %c6 = arith.constant 6 : index
    %c0_40 = arith.constant 0 : index
    %76 = vector.load %arg4[%c6, %c0_40] : memref<8x128xf32, #tpu.memory_space<vmem>>, vector<1x128xf32>
    %c7 = arith.constant 7 : index
    %c0_41 = arith.constant 0 : index
    %77 = vector.load %arg4[%c7, %c0_41] : memref<8x128xf32, #tpu.memory_space<vmem>>, vector<1x128xf32>
    %78 = vector.broadcast %76 : vector<1x128xf32> to vector<16x128xf32>
    %79 = arith.mulf %75, %78 : vector<16x128xf32>
    %cst_42 = arith.constant dense<0.000000e+00> : vector<16xf32>
    %80 = vector.multi_reduction <add>, %79, %cst_42 [1] : vector<16x128xf32> to vector<16xf32>
    %81 = vector.shape_cast %80 : vector<16xf32> to vector<16x1xf32>
    %82 = vector.extract_strided_slice %77 {offsets = [0, 0], sizes = [1, 1], strides = [1, 1]} : vector<1x128xf32> to vector<1x1xf32>
    %83 = vector.broadcast %82 : vector<1x1xf32> to vector<16x1xf32>
    %84 = arith.addf %81, %83 : vector<16x1xf32>
    %85 = tpu.iota {dimensions = array<i32: 1>} : vector<16x128xi32>
    %c32_i32 = arith.constant 32 : i32
    %86 = vector.broadcast %c32_i32 : i32 to vector<16x128xi32>
    %87 = arith.cmpi eq, %85, %86 : vector<16x128xi32>
    %88 = vector.shape_cast %84 : vector<16x1xf32> to vector<16x1xf32>
    %89 = vector.broadcast %88 : vector<16x1xf32> to vector<16x128xf32>
    %90 = arith.select %87, %89, %57 : vector<16x128xi1>, vector<16x128xf32>
    %c0_43 = arith.constant 0 : index
    %c0_44 = arith.constant 0 : index
    %91 = vector.load %arg6[%c0_43, %c0_44] : memref<16x128xf32, #tpu.memory_space<vmem>>, vector<16x128xf32>
    tpu.vector_store %arg6[%c0_43, %c0_44], %90 {strides = array<i32>} : memref<16x128xf32, #tpu.memory_space<vmem>>, vector<16x128xf32>,
    return
  }
  func.func @transform_0(%arg0: i32) -> (i32, i32, i32) {
    %c0_i32 = arith.constant 0 : i32
    %c0_i32_0 = arith.constant 0 : i32
    %c0_i32_1 = arith.constant 0 : i32
    return %c0_i32, %arg0, %c0_i32_0 : i32, i32, i32
  }
  func.func @transform_1(%arg0: i32) -> (i32, i32) {
    %c0_i32 = arith.constant 0 : i32
    %c0_i32_0 = arith.constant 0 : i32
    %c0_i32_1 = arith.constant 0 : i32
    return %c0_i32, %c0_i32_0 : i32, i32
  }
  func.func @transform_2(%arg0: i32) -> (i32, i32, i32) {
    %c0_i32 = arith.constant 0 : i32
    %c0_i32_0 = arith.constant 0 : i32
    %c0_i32_1 = arith.constant 0 : i32
    %c0_i32_2 = arith.constant 0 : i32
    return %c0_i32, %c0_i32_0, %c0_i32_1 : i32, i32, i32
  }
  func.func @transform_3(%arg0: i32) -> (i32, i32) {
    %c0_i32 = arith.constant 0 : i32
    %c0_i32_0 = arith.constant 0 : i32
    %c0_i32_1 = arith.constant 0 : i32
    return %c0_i32, %c0_i32_0 : i32, i32
  }
  func.func @transform_4(%arg0: i32) -> (i32, i32) {
    %c0_i32 = arith.constant 0 : i32
    %c0_i32_0 = arith.constant 0 : i32
    %c0_i32_1 = arith.constant 0 : i32
    return %c0_i32, %c0_i32_0 : i32, i32
  }
  func.func @transform_5(%arg0: i32) -> (i32, i32) {
    %c0_i32 = arith.constant 0 : i32
    %c0_i32_0 = arith.constant 0 : i32
    return %arg0, %c0_i32 : i32, i32
  }
}

</mosaic_0001>

<llo_original>
// kernel: tpu_custom_call.1
$region0: #{tpu_custom_call.1}
  #allocation0 [shape = 'u32[]', space=smem, size = 0x4, offset = 0x4, fixed_abs, tag = 'smem constant byte address 0x4 - core index']
  #allocation1 [shape = 'u32[144,128]{1,0:T(1,128)}', space=vmem, size = 0x12000, scoped, tag = 'internal scratch']
  %s0 = inlined_call_operand.hbm [shape: bf16[4,16,32], index: 0, kind: input, shape index: {}]
  %s1 = inlined_call_operand.hbm [shape: bf16[32,128], index: 1, kind: input, shape index: {}]
  %s2 = inlined_call_operand.hbm [shape: bf16[5,128,128], index: 2, kind: input, shape index: {}]
  %s3 = inlined_call_operand.vmem [shape: f32[8,128], index: 3, kind: input, shape index: {}]
  %s4 = inlined_call_operand.vmem [shape: f32[4,128], index: 4, kind: input, shape index: {}]
  %s5 = inlined_call_operand.hbm [shape: f32[16,128], index: 5, kind: output, shape index: {}]
  %s6 = sld [smem:[#allocation0]]
  $region42: #{tpu_custom_call.1} parent=0
    _
  %s8 = ssub.s32 1, %s6
  %s9 = scalar_select 0, %s8, %s6
  $region1: #{tpu_custom_call.1} parent=0
    #allocation2 [shape = 'u8[16384]{0}', space=vmem, size = 0x4000, scoped, tag = 'input window, operand 0, single buffered']
    #allocation3 [shape = 's32[1]{0}', space=sflag, size = 0x4, scoped, tag = 'scoped memory for tpu_custom_call.1']
    #allocation4 [shape = 's32[1]{0}', space=sflag, size = 0x4, scoped, tag = 'scoped memory for tpu_custom_call.1']
    #allocation5 [shape = 'u8[8192]{0}', space=vmem, size = 0x2000, scoped, tag = 'input window, operand 1, single buffered']
    #allocation6 [shape = 's32[1]{0}', space=sflag, size = 0x4, scoped, tag = 'scoped memory for tpu_custom_call.1']
    #allocation7 [shape = 'u8[163840]{0}', space=vmem, size = 0x28000, scoped, tag = 'input window, operand 2, single buffered']
    #allocation8 [shape = 'u8[8192]{0}', space=vmem, size = 0x2000, scoped, tag = 'output window, operand 0, single buffered']
    %10 = vsyncpa [#allocation3], 0
    %11 = vsyncpa [#allocation6], 0
    %12 = vsyncpa [#allocation4], 0
    // Predicated region
    $region2: #{tpu_custom_call.1} parent=1 // pred_check
      _
    $region3: #{tpu_custom_call.1} parent=1 // pred_check_branch
      %14 = sbr.rel (0) target = $region5
    $region4: #{tpu_custom_call.1} parent=1 // pred_region
      %s16 = ssub.s32 512, 512
      %17 = vsyncadd [#allocation3], %s16
      %s18 = sshll.u32 [#allocation2], 4
      %s19 = int_to_ptr.vmem [resolvable:$true] %s18
      %24 = dma.hbm_to_vmem [thread:$0]  %s0, 512, %s19, [#allocation3], 64, 64, 4
    $region5: #{tpu_custom_call.1} parent=1 // pred_fallthru
      _
    // Predicated region
    $region6: #{tpu_custom_call.1} parent=1 // pred_check
      _
    $region7: #{tpu_custom_call.1} parent=1 // pred_check_branch
      %26 = sbr.rel (0) target = $region9
    $region8: #{tpu_custom_call.1} parent=1 // pred_region
      %s28 = ssub.s32 256, 256
      %29 = vsyncadd [#allocation6], %s28
      %s30 = sshll.u32 [#allocation5], 4
      %s31 = int_to_ptr.vmem [resolvable:$true] %s30
      %36 = dma.hbm_to_vmem [thread:$0]  %s1, 256, %s31, [#allocation6], 64, 64, 4
    $region9: #{tpu_custom_call.1} parent=1 // pred_fallthru
      _
    // Predicated region
    $region10: #{tpu_custom_call.1} parent=1 // pred_check
      _
    $region11: #{tpu_custom_call.1} parent=1 // pred_check_branch
      %38 = sbr.rel (0) target = $region13
    $region12: #{tpu_custom_call.1} parent=1 // pred_region
      %s40 = ssub.s32 5120, 5120
      %41 = vsyncadd [#allocation6], %s40
      %s42 = sshll.u32 [#allocation7], 4
      %s43 = int_to_ptr.vmem [resolvable:$true] %s42
      %48 = dma.hbm_to_vmem [thread:$0]  %s2, 5120, %s43, [#allocation6], 64, 64, 4
    $region13: #{tpu_custom_call.1} parent=1 // pred_fallthru
      _
    // Predicated region
    $region14: #{tpu_custom_call.1} parent=1 // pred_check
      _
    $region15: #{tpu_custom_call.1} parent=1 // pred_check_branch
      %50 = sbr.rel (0) target = $region17
    $region16: #{tpu_custom_call.1} parent=1 // pred_region
      _
    $region17: #{tpu_custom_call.1} parent=1 // pred_fallthru
      _
    // Predicated region
    $region18: #{tpu_custom_call.1} parent=1 // pred_check
      _
    $region19: #{tpu_custom_call.1} parent=1 // pred_check_branch
      %52 = sbr.rel (0) target = $region21
    $region20: #{tpu_custom_call.1} parent=1 // pred_region
      _
    $region21: #{tpu_custom_call.1} parent=1 // pred_fallthru
      _
    // Predicated region
    $region22: #{tpu_custom_call.1} parent=1 // pred_check
      _
    $region23: #{tpu_custom_call.1} parent=1 // pred_check_branch
      %54 = sbr.rel (0) target = $region25
    $region24: #{tpu_custom_call.1} parent=1 // pred_region
      %55 = dma.done [#allocation3], 512
    $region25: #{tpu_custom_call.1} parent=1 // pred_fallthru
      _
    // Predicated region
    $region26: #{tpu_custom_call.1} parent=1 // pred_check
      _
    $region27: #{tpu_custom_call.1} parent=1 // pred_check_branch
      %57 = sbr.rel (0) target = $region29
    $region28: #{tpu_custom_call.1} parent=1 // pred_region
      %58 = dma.done [#allocation6], 256
    $region29: #{tpu_custom_call.1} parent=1 // pred_fallthru
      _
    // Predicated region
    $region30: #{tpu_custom_call.1} parent=1 // pred_check
      _
    $region31: #{tpu_custom_call.1} parent=1 // pred_check_branch
      %60 = sbr.rel (0) target = $region33
    $region32: #{tpu_custom_call.1} parent=1 // pred_region
      %61 = dma.done [#allocation6], 5120
    $region33: #{tpu_custom_call.1} parent=1 // pred_fallthru
      _
    %v63 = vld [vmem:[#allocation2] sm:$0xf]
    %v64 = vld [vmem:[#allocation2 + $0x4] sm:$0xf]
    %v65 = vld [vmem:[#allocation2 + $0x8] sm:$0xf]
    %v66 = vld [vmem:[#allocation2 + $0xc] sm:$0xf]
    %v67 = vld [vmem:[#allocation2 + $0x10] sm:$0xf]
    %v68 = vld [vmem:[#allocation2 + $0x14] sm:$0xf]
    %v69 = vld [vmem:[#allocation2 + $0x18] sm:$0xf]
    %v70 = vld [vmem:[#allocation2 + $0x1c] sm:$0xf]
    %v71 = vld [vmem:[#allocation5] sm:$0xf]
    %v72 = vld [vmem:[#allocation5 + $0x4] sm:$0xf]
    %v73 = vld [vmem:[#allocation5 + $0x8] sm:$0xf]
    %v74 = vld [vmem:[#allocation5 + $0xc] sm:$0xf]
    %v75 = vld [vmem:[%s3] sm:$0x1]
    %v76 = vlaneseq
    %v77 = vshrl.u32 %v76, 7
    %v78 = vsub.s32 0, %v77
    %v79 = vrot.slane %v75, %v78
    %v88 = vunpack.c.l.b16 %v63
    %v89 = vunpack.c.l.b16 %v64
    %v90 = vunpack.c.l.b16 %v65
    %v91 = vunpack.c.l.b16 %v66
    %v92 = vunpack.c.l.b16 %v67
    %v93 = vunpack.c.l.b16 %v68
    %v94 = vunpack.c.l.b16 %v69
    %v95 = vunpack.c.l.b16 %v70
    %v96 = vpack.c.b16 %v89, %v88
    %v97 = vpack.c.b16 %v91, %v90
    %v98 = vpack.c.b16 %v93, %v92
    %v99 = vpack.c.b16 %v95, %v94
    %v104 = vunpack.c.l.b16 %v71
    %v105 = vunpack.c.l.b16 %v72
    %v106 = vunpack.c.l.b16 %v73
    %v107 = vunpack.c.l.b16 %v74
    %v108 = vpack.c.b16 %v105, %v104
    %v109 = vpack.c.b16 %v107, %v106
    %vm112 = vcmask 261120
    %v114 = vsel %vm112, %v96, 0
    %v117 = vsel %vm112, %v97, 0
    %v120 = vsel %vm112, %v98, 0
    %v123 = vsel %vm112, %v99, 0
    %125 = vmatprep.subr.bf16.mxu0 0
    %126 = vmatpush1.bf16.msra.mxu0 %v108
    %127 = vmatprep.subr.bf16.mxu0 0
    %128 = vmatpush1.bf16.msra.mxu0 %v109
    %129 = vmatprep.subr.bf16.mxu0 0
    %130 = vmatpush1.bf16.msra.mxu0 0
    %131 = vmatprep.subr.bf16.mxu0 0
    %132 = vmatpush1.bf16.msra.mxu0 0
    %133 = vmatprep.subr.bf16.mxu0 0
    %134 = vmatpush1.bf16.msra.mxu0 0
    %135 = vmatprep.subr.bf16.mxu0 0
    %136 = vmatpush1.bf16.msra.mxu0 0
    %137 = vmatprep.subr.bf16.mxu0 0
    %138 = vmatpush1.bf16.msra.mxu0 0
    %139 = vmatprep.subr.bf16.mxu0 0
    %140 = vmatpush1.bf16.msra.mxu0 0
    %141 = vmatprep.subr.bf16.mxu0 0
    %142 = vmatpush1.bf16.msra.mxu0 0
    %143 = vmatprep.subr.bf16.mxu0 0
    %144 = vmatpush1.bf16.msra.mxu0 0
    %145 = vmatprep.subr.bf16.mxu0 0
    %146 = vmatpush1.bf16.msra.mxu0 0
    %147 = vmatprep.subr.bf16.mxu0 0
    %148 = vmatpush1.bf16.msra.mxu0 0
    %149 = vmatprep.subr.bf16.mxu0 0
    %150 = vmatpush1.bf16.msra.mxu0 0
    %151 = vmatprep.subr.bf16.mxu0 0
    %152 = vmatpush1.bf16.msra.mxu0 0
    %153 = vmatprep.subr.bf16.mxu0 0
    %154 = vmatpush1.bf16.msra.mxu0 0
    %155 = vmatprep.subr.bf16.mxu0 0
    %156 = vmatpush1.bf16.msra.mxu0 0
    %157 = vmatprep.mubr.bf16.mxu0 0
    %158 = vmatmul.mubr.bf16.gmra.mrb[0].mxu0 %v114
    %v159 = vpop.f32.mrb[0].mxu0
    %v160 = vadd.f32 %v79, %v159
    %v161 = vpop.f32.mrb[0].mxu0
    %v162 = vpop.f32.mrb[0].mxu0
    %v163 = vadd.f32 %v79, %v162
    %v164 = vpop.f32.mrb[0].mxu0
    %165 = vmatprep.mubr.bf16.mxu0 0
    %166 = vmatmul.mubr.bf16.gmra.mrb[0].mxu0 %v117
    %v167 = vpop.f32.mrb[0].mxu0
    %v168 = vadd.f32 %v79, %v167
    %v169 = vpop.f32.mrb[0].mxu0
    %v170 = vpop.f32.mrb[0].mxu0
    %v171 = vadd.f32 %v79, %v170
    %v172 = vpop.f32.mrb[0].mxu0
    %173 = vmatprep.mubr.bf16.mxu0 0
    %174 = vmatmul.mubr.bf16.gmra.mrb[0].mxu0 %v120
    %v175 = vpop.f32.mrb[0].mxu0
    %v176 = vadd.f32 %v79, %v175
    %v177 = vpop.f32.mrb[0].mxu0
    %v178 = vpop.f32.mrb[0].mxu0
    %v179 = vadd.f32 %v79, %v178
    %v180 = vpop.f32.mrb[0].mxu0
    %181 = vmatprep.mubr.bf16.mxu0 0
    %182 = vmatmul.mubr.bf16.gmra.mrb[0].mxu0 %v123
    %v183 = vpop.f32.mrb[0].mxu0
    %v184 = vadd.f32 %v79, %v183
    %v185 = vpop.f32.mrb[0].mxu0
    %v186 = vpop.f32.mrb[0].mxu0
    %v187 = vadd.f32 %v79, %v186
    %v188 = vpop.f32.mrb[0].mxu0
    %189 = vdwg.mxu0
    %v190 = vmax.f32 %v160, 0.0
    %v191 = vmax.f32 %v163, 0.0
    %v192 = vmax.f32 %v168, 0.0
    %v193 = vmax.f32 %v171, 0.0
    %v194 = vmax.f32 %v176, 0.0
    %v195 = vmax.f32 %v179, 0.0
    %v196 = vmax.f32 %v184, 0.0
    %v197 = vmax.f32 %v187, 0.0
    %v198 = vpack.c.bf16 %v191, %v190
    %v199 = vpack.c.bf16 %v193, %v192
    %v200 = vpack.c.bf16 %v195, %v194
    %v201 = vpack.c.bf16 %v197, %v196
    %v202 = vld [vmem:[#allocation7] sm:$0xf]
    %v203 = vld [vmem:[#allocation7 + $0x4] sm:$0xf]
    %v204 = vld [vmem:[#allocation7 + $0x8] sm:$0xf]
    %v205 = vld [vmem:[#allocation7 + $0xc] sm:$0xf]
    %v206 = vld [vmem:[#allocation7 + $0x10] sm:$0xf]
    %v207 = vld [vmem:[#allocation7 + $0x14] sm:$0xf]
    %v208 = vld [vmem:[#allocation7 + $0x18] sm:$0xf]
    %v209 = vld [vmem:[#allocation7 + $0x1c] sm:$0xf]
    %v210 = vld [vmem:[#allocation7 + $0x20] sm:$0xf]
    %v211 = vld [vmem:[#allocation7 + $0x24] sm:$0xf]
    %v212 = vld [vmem:[#allocation7 + $0x28] sm:$0xf]
    %v213 = vld [vmem:[#allocation7 + $0x2c] sm:$0xf]
    %v214 = vld [vmem:[#allocation7 + $0x30] sm:$0xf]
    %v215 = vld [vmem:[#allocation7 + $0x34] sm:$0xf]
    %v216 = vld [vmem:[#allocation7 + $0x38] sm:$0xf]
    %v217 = vld [vmem:[#allocation7 + $0x3c] sm:$0xf]
    %v218 = vld [vmem:[%s3 + $0x1] sm:$0x1]
    %v219 = vlaneseq
    %v220 = vshrl.u32 %v219, 7
    %v221 = vsub.s32 0, %v220
    %v222 = vrot.slane %v218, %v221
    %v239 = vunpack.c.l.b16 %v202
    %v240 = vunpack.c.l.b16 %v203
    %v241 = vunpack.c.l.b16 %v204
    %v242 = vunpack.c.l.b16 %v205
    %v243 = vunpack.c.l.b16 %v206
    %v244 = vunpack.c.l.b16 %v207
    %v245 = vunpack.c.l.b16 %v208
    %v246 = vunpack.c.l.b16 %v209
    %v247 = vunpack.c.l.b16 %v210
    %v248 = vunpack.c.l.b16 %v211
    %v249 = vunpack.c.l.b16 %v212
    %v250 = vunpack.c.l.b16 %v213
    %v251 = vunpack.c.l.b16 %v214
    %v252 = vunpack.c.l.b16 %v215
    %v253 = vunpack.c.l.b16 %v216
    %v254 = vunpack.c.l.b16 %v217
    %v255 = vpack.c.b16 %v240, %v239
    %v256 = vpack.c.b16 %v242, %v241
    %v257 = vpack.c.b16 %v244, %v243
    %v258 = vpack.c.b16 %v246, %v245
    %v259 = vpack.c.b16 %v248, %v247
    %v260 = vpack.c.b16 %v250, %v249
    %v261 = vpack.c.b16 %v252, %v251
    %v262 = vpack.c.b16 %v254, %v253
    %271 = vmatprep.subr.bf16.mxu0 0
    %272 = vmatpush1.bf16.msra.mxu0 %v255
    %273 = vmatprep.subr.bf16.mxu0 0
    %274 = vmatpush1.bf16.msra.mxu0 %v256
    %275 = vmatprep.subr.bf16.mxu0 0
    %276 = vmatpush1.bf16.msra.mxu0 %v257
    %277 = vmatprep.subr.bf16.mxu0 0
    %278 = vmatpush1.bf16.msra.mxu0 %v258
    %279 = vmatprep.subr.bf16.mxu0 0
    %280 = vmatpush1.bf16.msra.mxu0 %v259
    %281 = vmatprep.subr.bf16.mxu0 0
    %282 = vmatpush1.bf16.msra.mxu0 %v260
    %283 = vmatprep.subr.bf16.mxu0 0
    %284 = vmatpush1.bf16.msra.mxu0 %v261
    %285 = vmatprep.subr.bf16.mxu0 0
    %286 = vmatpush1.bf16.msra.mxu0 %v262
    %287 = vmatprep.subr.bf16.mxu0 0
    %288 = vmatpush1.bf16.msra.mxu0 0
    %289 = vmatprep.subr.bf16.mxu0 0
    %290 = vmatpush1.bf16.msra.mxu0 0
    %291 = vmatprep.subr.bf16.mxu0 0
    %292 = vmatpush1.bf16.msra.mxu0 0
    %293 = vmatprep.subr.bf16.mxu0 0
    %294 = vmatpush1.bf16.msra.mxu0 0
    %295 = vmatprep.subr.bf16.mxu0 0
    %296 = vmatpush1.bf16.msra.mxu0 0
    %297 = vmatprep.subr.bf16.mxu0 0
    %298 = vmatpush1.bf16.msra.mxu0 0
    %299 = vmatprep.subr.bf16.mxu0 0
    %300 = vmatpush1.bf16.msra.mxu0 0
    %301 = vmatprep.subr.bf16.mxu0 0
    %302 = vmatpush1.bf16.msra.mxu0 0
    %303 = vmatprep.mubr.bf16.mxu0 0
    %304 = vmatmul.mubr.bf16.gmra.mrb[0].mxu0 %v198
    %v305 = vpop.f32.mrb[0].mxu0
    %v306 = vadd.f32 %v222, %v305
    %v307 = vpop.f32.mrb[0].mxu0
    %v308 = vpop.f32.mrb[0].mxu0
    %v309 = vadd.f32 %v222, %v308
    %v310 = vpop.f32.mrb[0].mxu0
    %311 = vmatprep.mubr.bf16.mxu0 0
    %312 = vmatmul.mubr.bf16.gmra.mrb[0].mxu0 %v199
    %v313 = vpop.f32.mrb[0].mxu0
    %v314 = vadd.f32 %v222, %v313
    %v315 = vpop.f32.mrb[0].mxu0
    %v316 = vpop.f32.mrb[0].mxu0
    %v317 = vadd.f32 %v222, %v316
    %v318 = vpop.f32.mrb[0].mxu0
    %319 = vmatprep.mubr.bf16.mxu0 0
    %320 = vmatmul.mubr.bf16.gmra.mrb[0].mxu0 %v200
    %v321 = vpop.f32.mrb[0].mxu0
    %v322 = vadd.f32 %v222, %v321
    %v323 = vpop.f32.mrb[0].mxu0
    %v324 = vpop.f32.mrb[0].mxu0
    %v325 = vadd.f32 %v222, %v324
    %v326 = vpop.f32.mrb[0].mxu0
    %327 = vmatprep.mubr.bf16.mxu0 0
    %328 = vmatmul.mubr.bf16.gmra.mrb[0].mxu0 %v201
    %v329 = vpop.f32.mrb[0].mxu0
    %v330 = vadd.f32 %v222, %v329
    %v331 = vpop.f32.mrb[0].mxu0
    %v332 = vpop.f32.mrb[0].mxu0
    %v333 = vadd.f32 %v222, %v332
    %v334 = vpop.f32.mrb[0].mxu0
    %335 = vdwg.mxu0
    %v336 = vmax.f32 %v306, 0.0
    %v337 = vmax.f32 %v309, 0.0
    %v338 = vmax.f32 %v314, 0.0
    %v339 = vmax.f32 %v317, 0.0
    %v340 = vmax.f32 %v322, 0.0
    %v341 = vmax.f32 %v325, 0.0
    %v342 = vmax.f32 %v330, 0.0
    %v343 = vmax.f32 %v333, 0.0
    %v344 = vld [vmem:[%s4] sm:$0xf]
    %v345 = vlaneseq
    %v346 = vshrl.u32 %v345, 7
    %v347 = vsub.s32 0, %v346
    %v348 = vrot.slane %v344, %v347
    %v349 = vmul.f32 %v348, %v336
    %v350 = vmul.f32 %v348, %v337
    %v351 = vadd.f32 %v349, 0.0
    %v352 = vadd.f32 %v350, 0.0
    %v353 = vlaneseq
    %v354 = vshrl.u32 %v353, 7
    %v355 = vsub.s32 1, %v354
    %v356 = vrot.slane %v344, %v355
    %v357 = vmul.f32 %v356, %v338
    %v358 = vmul.f32 %v356, %v339
    %v359 = vadd.f32 %v351, %v357
    %v360 = vadd.f32 %v352, %v358
    %v361 = vlaneseq
    %v362 = vshrl.u32 %v361, 7
    %v363 = vsub.s32 2, %v362
    %v364 = vrot.slane %v344, %v363
    %v365 = vmul.f32 %v364, %v340
    %v366 = vmul.f32 %v364, %v341
    %v367 = vadd.f32 %v359, %v365
    %v368 = vadd.f32 %v360, %v366
    %v369 = vlaneseq
    %v370 = vshrl.u32 %v369, 7
    %v371 = vsub.s32 3, %v370
    %v372 = vrot.slane %v344, %v371
    %v373 = vmul.f32 %v372, %v342
    %v374 = vmul.f32 %v372, %v343
    %v375 = vadd.f32 %v367, %v373
    %v376 = vadd.f32 %v368, %v374
    %v377 = vpack.c.bf16 %v376, %v375
    %s378 = scalar_lea.vmem [#allocation7], 64
    %v379 = vld [vmem:[%s378] sm:$0xf]
    %v380 = vld [vmem:[%s378 + $0x4] sm:$0xf]
    %v381 = vld [vmem:[%s378 + $0x8] sm:$0xf]
    %v382 = vld [vmem:[%s378 + $0xc] sm:$0xf]
    %v383 = vld [vmem:[%s378 + $0x10] sm:$0xf]
    %v384 = vld [vmem:[%s378 + $0x14] sm:$0xf]
    %v385 = vld [vmem:[%s378 + $0x18] sm:$0xf]
    %v386 = vld [vmem:[%s378 + $0x1c] sm:$0xf]
    %v387 = vld [vmem:[%s378 + $0x20] sm:$0xf]
    %v388 = vld [vmem:[%s378 + $0x24] sm:$0xf]
    %v389 = vld [vmem:[%s378 + $0x28] sm:$0xf]
    %v390 = vld [vmem:[%s378 + $0x2c] sm:$0xf]
    %v391 = vld [vmem:[%s378 + $0x30] sm:$0xf]
    %v392 = vld [vmem:[%s378 + $0x34] sm:$0xf]
    %v393 = vld [vmem:[%s378 + $0x38] sm:$0xf]
    %v394 = vld [vmem:[%s378 + $0x3c] sm:$0xf]
    %v395 = vld [vmem:[%s3 + $0x2] sm:$0x1]
    %v396 = vlaneseq
    %v397 = vshrl.u32 %v396, 7
    %v398 = vsub.s32 0, %v397
    %v399 = vrot.slane %v395, %v398
    %v416 = vunpack.c.l.b16 %v379
    %v417 = vunpack.c.l.b16 %v380
    %v418 = vunpack.c.l.b16 %v381
    %v419 = vunpack.c.l.b16 %v382
    %v420 = vunpack.c.l.b16 %v383
    %v421 = vunpack.c.l.b16 %v384
    %v422 = vunpack.c.l.b16 %v385
    %v423 = vunpack.c.l.b16 %v386
    %v424 = vunpack.c.l.b16 %v387
    %v425 = vunpack.c.l.b16 %v388
    %v426 = vunpack.c.l.b16 %v389
    %v427 = vunpack.c.l.b16 %v390
    %v428 = vunpack.c.l.b16 %v391
    %v429 = vunpack.c.l.b16 %v392
    %v430 = vunpack.c.l.b16 %v393
    %v431 = vunpack.c.l.b16 %v394
    %v432 = vpack.c.b16 %v417, %v416
    %v433 = vpack.c.b16 %v419, %v418
    %v434 = vpack.c.b16 %v421, %v420
    %v435 = vpack.c.b16 %v423, %v422
    %v436 = vpack.c.b16 %v425, %v424
    %v437 = vpack.c.b16 %v427, %v426
    %v438 = vpack.c.b16 %v429, %v428
    %v439 = vpack.c.b16 %v431, %v430
    %448 = vmatprep.subr.bf16.mxu0 0
    %449 = vmatpush1.bf16.msra.mxu0 %v432
    %450 = vmatprep.subr.bf16.mxu0 0
    %451 = vmatpush1.bf16.msra.mxu0 %v433
    %452 = vmatprep.subr.bf16.mxu0 0
    %453 = vmatpush1.bf16.msra.mxu0 %v434
    %454 = vmatprep.subr.bf16.mxu0 0
    %455 = vmatpush1.bf16.msra.mxu0 %v435
    %456 = vmatprep.subr.bf16.mxu0 0
    %457 = vmatpush1.bf16.msra.mxu0 %v436
    %458 = vmatprep.subr.bf16.mxu0 0
    %459 = vmatpush1.bf16.msra.mxu0 %v437
    %460 = vmatprep.subr.bf16.mxu0 0
    %461 = vmatpush1.bf16.msra.mxu0 %v438
    %462 = vmatprep.subr.bf16.mxu0 0
    %463 = vmatpush1.bf16.msra.mxu0 %v439
    %464 = vmatprep.subr.bf16.mxu0 0
    %465 = vmatpush1.bf16.msra.mxu0 0
    %466 = vmatprep.subr.bf16.mxu0 0
    %467 = vmatpush1.bf16.msra.mxu0 0
    %468 = vmatprep.subr.bf16.mxu0 0
    %469 = vmatpush1.bf16.msra.mxu0 0
    %470 = vmatprep.subr.bf16.mxu0 0
    %471 = vmatpush1.bf16.msra.mxu0 0
    %472 = vmatprep.subr.bf16.mxu0 0
    %473 = vmatpush1.bf16.msra.mxu0 0
    %474 = vmatprep.subr.bf16.mxu0 0
    %475 = vmatpush1.bf16.msra.mxu0 0
    %476 = vmatprep.subr.bf16.mxu0 0
    %477 = vmatpush1.bf16.msra.mxu0 0
    %478 = vmatprep.subr.bf16.mxu0 0
    %479 = vmatpush1.bf16.msra.mxu0 0
    %480 = vmatprep.mubr.bf16.mxu0 0
    %481 = vmatmul.mubr.bf16.gmra.mrb[0].mxu0 %v377
    %v482 = vpop.f32.mrb[0].mxu0
    %v483 = vadd.f32 %v399, %v482
    %v484 = vpop.f32.mrb[0].mxu0
    %v485 = vpop.f32.mrb[0].mxu0
    %v486 = vadd.f32 %v399, %v485
    %v487 = vpop.f32.mrb[0].mxu0
    %488 = vdwg.mxu0
    %v489 = vmax.f32 %v483, 0.0
    %v490 = vmax.f32 %v486, 0.0
    %v491 = vpack.c.bf16 %v490, %v489
    %s492 = scalar_lea.vmem [#allocation7], 128
    %v493 = vld [vmem:[%s492] sm:$0xf]
    %v494 = vld [vmem:[%s492 + $0x4] sm:$0xf]
    %v495 = vld [vmem:[%s492 + $0x8] sm:$0xf]
    %v496 = vld [vmem:[%s492 + $0xc] sm:$0xf]
    %v497 = vld [vmem:[%s492 + $0x10] sm:$0xf]
    %v498 = vld [vmem:[%s492 + $0x14] sm:$0xf]
    %v499 = vld [vmem:[%s492 + $0x18] sm:$0xf]
    %v500 = vld [vmem:[%s492 + $0x1c] sm:$0xf]
    %v501 = vld [vmem:[%s492 + $0x20] sm:$0xf]
    %v502 = vld [vmem:[%s492 + $0x24] sm:$0xf]
    %v503 = vld [vmem:[%s492 + $0x28] sm:$0xf]
    %v504 = vld [vmem:[%s492 + $0x2c] sm:$0xf]
    %v505 = vld [vmem:[%s492 + $0x30] sm:$0xf]
    %v506 = vld [vmem:[%s492 + $0x34] sm:$0xf]
    %v507 = vld [vmem:[%s492 + $0x38] sm:$0xf]
    %v508 = vld [vmem:[%s492 + $0x3c] sm:$0xf]
    %v509 = vld [vmem:[%s3 + $0x3] sm:$0x1]
    %v510 = vlaneseq
    %v511 = vshrl.u32 %v510, 7
    %v512 = vsub.s32 0, %v511
    %v513 = vrot.slane %v509, %v512
    %v530 = vunpack.c.l.b16 %v493
    %v531 = vunpack.c.l.b16 %v494
    %v532 = vunpack.c.l.b16 %v495
    %v533 = vunpack.c.l.b16 %v496
    %v534 = vunpack.c.l.b16 %v497
    %v535 = vunpack.c.l.b16 %v498
    %v536 = vunpack.c.l.b16 %v499
    %v537 = vunpack.c.l.b16 %v500
    %v538 = vunpack.c.l.b16 %v501
    %v539 = vunpack.c.l.b16 %v502
    %v540 = vunpack.c.l.b16 %v503
    %v541 = vunpack.c.l.b16 %v504
    %v542 = vunpack.c.l.b16 %v505
    %v543 = vunpack.c.l.b16 %v506
    %v544 = vunpack.c.l.b16 %v507
    %v545 = vunpack.c.l.b16 %v508
    %v546 = vpack.c.b16 %v531, %v530
    %v547 = vpack.c.b16 %v533, %v532
    %v548 = vpack.c.b16 %v535, %v534
    %v549 = vpack.c.b16 %v537, %v536
    %v550 = vpack.c.b16 %v539, %v538
    %v551 = vpack.c.b16 %v541, %v540
    %v552 = vpack.c.b16 %v543, %v542
    %v553 = vpack.c.b16 %v545, %v544
    %562 = vmatprep.subr.bf16.mxu0 0
    %563 = vmatpush1.bf16.msra.mxu0 %v546
    %564 = vmatprep.subr.bf16.mxu0 0
    %565 = vmatpush1.bf16.msra.mxu0 %v547
    %566 = vmatprep.subr.bf16.mxu0 0
    %567 = vmatpush1.bf16.msra.mxu0 %v548
    %568 = vmatprep.subr.bf16.mxu0 0
    %569 = vmatpush1.bf16.msra.mxu0 %v549
    %570 = vmatprep.subr.bf16.mxu0 0
    %571 = vmatpush1.bf16.msra.mxu0 %v550
    %572 = vmatprep.subr.bf16.mxu0 0
    %573 = vmatpush1.bf16.msra.mxu0 %v551
    %574 = vmatprep.subr.bf16.mxu0 0
    %575 = vmatpush1.bf16.msra.mxu0 %v552
    %576 = vmatprep.subr.bf16.mxu0 0
    %577 = vmatpush1.bf16.msra.mxu0 %v553
    %578 = vmatprep.subr.bf16.mxu0 0
    %579 = vmatpush1.bf16.msra.mxu0 0
    %580 = vmatprep.subr.bf16.mxu0 0
    %581 = vmatpush1.bf16.msra.mxu0 0
    %582 = vmatprep.subr.bf16.mxu0 0
    %583 = vmatpush1.bf16.msra.mxu0 0
    %584 = vmatprep.subr.bf16.mxu0 0
    %585 = vmatpush1.bf16.msra.mxu0 0
    %586 = vmatprep.subr.bf16.mxu0 0
    %587 = vmatpush1.bf16.msra.mxu0 0
    %588 = vmatprep.subr.bf16.mxu0 0
    %589 = vmatpush1.bf16.msra.mxu0 0
    %590 = vmatprep.subr.bf16.mxu0 0
    %591 = vmatpush1.bf16.msra.mxu0 0
    %592 = vmatprep.subr.bf16.mxu0 0
    %593 = vmatpush1.bf16.msra.mxu0 0
    %594 = vmatprep.mubr.bf16.mxu0 0
    %595 = vmatmul.mubr.bf16.gmra.mrb[0].mxu0 %v491
    %v596 = vpop.f32.mrb[0].mxu0
    %v597 = vadd.f32 %v513, %v596
    %v598 = vpop.f32.mrb[0].mxu0
    %v599 = vpop.f32.mrb[0].mxu0
    %v600 = vadd.f32 %v513, %v599
    %v601 = vpop.f32.mrb[0].mxu0
    %602 = vdwg.mxu0
    %v603 = vmax.f32 %v597, 0.0
    %v604 = vmax.f32 %v600, 0.0
    %v605 = vpack.c.bf16 %v604, %v603
    %s606 = scalar_lea.vmem [#allocation7], 192
    %v607 = vld [vmem:[%s606] sm:$0xf]
    %v608 = vld [vmem:[%s606 + $0x4] sm:$0xf]
    %v609 = vld [vmem:[%s606 + $0x8] sm:$0xf]
    %v610 = vld [vmem:[%s606 + $0xc] sm:$0xf]
    %v611 = vld [vmem:[%s606 + $0x10] sm:$0xf]
    %v612 = vld [vmem:[%s606 + $0x14] sm:$0xf]
    %v613 = vld [vmem:[%s606 + $0x18] sm:$0xf]
    %v614 = vld [vmem:[%s606 + $0x1c] sm:$0xf]
    %v615 = vld [vmem:[%s606 + $0x20] sm:$0xf]
    %v616 = vld [vmem:[%s606 + $0x24] sm:$0xf]
    %v617 = vld [vmem:[%s606 + $0x28] sm:$0xf]
    %v618 = vld [vmem:[%s606 + $0x2c] sm:$0xf]
    %v619 = vld [vmem:[%s606 + $0x30] sm:$0xf]
    %v620 = vld [vmem:[%s606 + $0x34] sm:$0xf]
    %v621 = vld [vmem:[%s606 + $0x38] sm:$0xf]
    %v622 = vld [vmem:[%s606 + $0x3c] sm:$0xf]
    %v623 = vld [vmem:[%s3 + $0x4] sm:$0x1]
    %v624 = vlaneseq
    %v625 = vshrl.u32 %v624, 7
    %v626 = vsub.s32 0, %v625
    %v627 = vrot.slane %v623, %v626
    %v644 = vunpack.c.l.b16 %v607
    %v645 = vunpack.c.l.b16 %v608
    %v646 = vunpack.c.l.b16 %v609
    %v647 = vunpack.c.l.b16 %v610
    %v648 = vunpack.c.l.b16 %v611
    %v649 = vunpack.c.l.b16 %v612
    %v650 = vunpack.c.l.b16 %v613
    %v651 = vunpack.c.l.b16 %v614
    %v652 = vunpack.c.l.b16 %v615
    %v653 = vunpack.c.l.b16 %v616
    %v654 = vunpack.c.l.b16 %v617
    %v655 = vunpack.c.l.b16 %v618
    %v656 = vunpack.c.l.b16 %v619
    %v657 = vunpack.c.l.b16 %v620
    %v658 = vunpack.c.l.b16 %v621
    %v659 = vunpack.c.l.b16 %v622
    %v660 = vpack.c.b16 %v645, %v644
    %v661 = vpack.c.b16 %v647, %v646
    %v662 = vpack.c.b16 %v649, %v648
    %v663 = vpack.c.b16 %v651, %v650
    %v664 = vpack.c.b16 %v653, %v652
    %v665 = vpack.c.b16 %v655, %v654
    %v666 = vpack.c.b16 %v657, %v656
    %v667 = vpack.c.b16 %v659, %v658
    %676 = vmatprep.subr.bf16.mxu0 0
    %677 = vmatpush1.bf16.msra.mxu0 %v660
    %678 = vmatprep.subr.bf16.mxu0 0
    %679 = vmatpush1.bf16.msra.mxu0 %v661
    %680 = vmatprep.subr.bf16.mxu0 0
    %681 = vmatpush1.bf16.msra.mxu0 %v662
    %682 = vmatprep.subr.bf16.mxu0 0
    %683 = vmatpush1.bf16.msra.mxu0 %v663
    %684 = vmatprep.subr.bf16.mxu0 0
    %685 = vmatpush1.bf16.msra.mxu0 %v664
    %686 = vmatprep.subr.bf16.mxu0 0
    %687 = vmatpush1.bf16.msra.mxu0 %v665
    %688 = vmatprep.subr.bf16.mxu0 0
    %689 = vmatpush1.bf16.msra.mxu0 %v666
    %690 = vmatprep.subr.bf16.mxu0 0
    %691 = vmatpush1.bf16.msra.mxu0 %v667
    %692 = vmatprep.subr.bf16.mxu0 0
    %693 = vmatpush1.bf16.msra.mxu0 0
    %694 = vmatprep.subr.bf16.mxu0 0
    %695 = vmatpush1.bf16.msra.mxu0 0
    %696 = vmatprep.subr.bf16.mxu0 0
    %697 = vmatpush1.bf16.msra.mxu0 0
    %698 = vmatprep.subr.bf16.mxu0 0
    %699 = vmatpush1.bf16.msra.mxu0 0
    %700 = vmatprep.subr.bf16.mxu0 0
    %701 = vmatpush1.bf16.msra.mxu0 0
    %702 = vmatprep.subr.bf16.mxu0 0
    %703 = vmatpush1.bf16.msra.mxu0 0
    %704 = vmatprep.subr.bf16.mxu0 0
    %705 = vmatpush1.bf16.msra.mxu0 0
    %706 = vmatprep.subr.bf16.mxu0 0
    %707 = vmatpush1.bf16.msra.mxu0 0
    %708 = vmatprep.mubr.bf16.mxu0 0
    %709 = vmatmul.mubr.bf16.gmra.mrb[0].mxu0 %v605
    %v710 = vpop.f32.mrb[0].mxu0
    %v711 = vadd.f32 %v627, %v710
    %v712 = vpop.f32.mrb[0].mxu0
    %v713 = vpop.f32.mrb[0].mxu0
    %v714 = vadd.f32 %v627, %v713
    %v715 = vpop.f32.mrb[0].mxu0
    %716 = vdwg.mxu0
    %v717 = vmax.f32 %v711, 0.0
    %v718 = vmax.f32 %v714, 0.0
    %v719 = vpack.c.bf16 %v718, %v717
    %s720 = scalar_lea.vmem [#allocation7], 256
    %v721 = vld [vmem:[%s720] sm:$0xf]
    %v722 = vld [vmem:[%s720 + $0x4] sm:$0xf]
    %v723 = vld [vmem:[%s720 + $0x8] sm:$0xf]
    %v724 = vld [vmem:[%s720 + $0xc] sm:$0xf]
    %v725 = vld [vmem:[%s720 + $0x10] sm:$0xf]
    %v726 = vld [vmem:[%s720 + $0x14] sm:$0xf]
    %v727 = vld [vmem:[%s720 + $0x18] sm:$0xf]
    %v728 = vld [vmem:[%s720 + $0x1c] sm:$0xf]
    %v729 = vld [vmem:[%s720 + $0x20] sm:$0xf]
    %v730 = vld [vmem:[%s720 + $0x24] sm:$0xf]
    %v731 = vld [vmem:[%s720 + $0x28] sm:$0xf]
    %v732 = vld [vmem:[%s720 + $0x2c] sm:$0xf]
    %v733 = vld [vmem:[%s720 + $0x30] sm:$0xf]
    %v734 = vld [vmem:[%s720 + $0x34] sm:$0xf]
    %v735 = vld [vmem:[%s720 + $0x38] sm:$0xf]
    %v736 = vld [vmem:[%s720 + $0x3c] sm:$0xf]
    %v737 = vld [vmem:[%s3 + $0x5] sm:$0x1]
    %v738 = vlaneseq
    %v739 = vshrl.u32 %v738, 7
    %v740 = vsub.s32 0, %v739
    %v741 = vrot.slane %v737, %v740
    %v758 = vunpack.c.l.b16 %v721
    %v759 = vunpack.c.l.b16 %v722
    %v760 = vunpack.c.l.b16 %v723
    %v761 = vunpack.c.l.b16 %v724
    %v762 = vunpack.c.l.b16 %v725
    %v763 = vunpack.c.l.b16 %v726
    %v764 = vunpack.c.l.b16 %v727
    %v765 = vunpack.c.l.b16 %v728
    %v766 = vunpack.c.l.b16 %v729
    %v767 = vunpack.c.l.b16 %v730
    %v768 = vunpack.c.l.b16 %v731
    %v769 = vunpack.c.l.b16 %v732
    %v770 = vunpack.c.l.b16 %v733
    %v771 = vunpack.c.l.b16 %v734
    %v772 = vunpack.c.l.b16 %v735
    %v773 = vunpack.c.l.b16 %v736
    %v774 = vpack.c.b16 %v759, %v758
    %v775 = vpack.c.b16 %v761, %v760
    %v776 = vpack.c.b16 %v763, %v762
    %v777 = vpack.c.b16 %v765, %v764
    %v778 = vpack.c.b16 %v767, %v766
    %v779 = vpack.c.b16 %v769, %v768
    %v780 = vpack.c.b16 %v771, %v770
    %v781 = vpack.c.b16 %v773, %v772
    %790 = vmatprep.subr.bf16.mxu0 0
    %791 = vmatpush1.bf16.msra.mxu0 %v774
    %792 = vmatprep.subr.bf16.mxu0 0
    %793 = vmatpush1.bf16.msra.mxu0 %v775
    %794 = vmatprep.subr.bf16.mxu0 0
    %795 = vmatpush1.bf16.msra.mxu0 %v776
    %796 = vmatprep.subr.bf16.mxu0 0
    %797 = vmatpush1.bf16.msra.mxu0 %v777
    %798 = vmatprep.subr.bf16.mxu0 0
    %799 = vmatpush1.bf16.msra.mxu0 %v778
    %800 = vmatprep.subr.bf16.mxu0 0
    %801 = vmatpush1.bf16.msra.mxu0 %v779
    %802 = vmatprep.subr.bf16.mxu0 0
    %803 = vmatpush1.bf16.msra.mxu0 %v780
    %804 = vmatprep.subr.bf16.mxu0 0
    %805 = vmatpush1.bf16.msra.mxu0 %v781
    %806 = vmatprep.subr.bf16.mxu0 0
    %807 = vmatpush1.bf16.msra.mxu0 0
    %808 = vmatprep.subr.bf16.mxu0 0
    %809 = vmatpush1.bf16.msra.mxu0 0
    %810 = vmatprep.subr.bf16.mxu0 0
    %811 = vmatpush1.bf16.msra.mxu0 0
    %812 = vmatprep.subr.bf16.mxu0 0
    %813 = vmatpush1.bf16.msra.mxu0 0
    %814 = vmatprep.subr.bf16.mxu0 0
    %815 = vmatpush1.bf16.msra.mxu0 0
    %816 = vmatprep.subr.bf16.mxu0 0
    %817 = vmatpush1.bf16.msra.mxu0 0
    %818 = vmatprep.subr.bf16.mxu0 0
    %819 = vmatpush1.bf16.msra.mxu0 0
    %820 = vmatprep.subr.bf16.mxu0 0
    %821 = vmatpush1.bf16.msra.mxu0 0
    %822 = vmatprep.mubr.bf16.mxu0 0
    %823 = vmatmul.mubr.bf16.gmra.mrb[0].mxu0 %v719
    %v824 = vpop.f32.mrb[0].mxu0
    %v825 = vadd.f32 %v741, %v824
    %v826 = vpop.f32.mrb[0].mxu0
    %v827 = vpop.f32.mrb[0].mxu0
    %v828 = vadd.f32 %v741, %v827
    %v829 = vpop.f32.mrb[0].mxu0
    %830 = vdwg.mxu0
    %v831 = vmax.f32 %v825, 0.0
    %v832 = vmax.f32 %v828, 0.0
    %v833 = vld [vmem:[%s3 + $0x6] sm:$0x1]
    %v834 = vld [vmem:[%s3 + $0x7] sm:$0x1]
    %v835 = vlaneseq
    %v836 = vshrl.u32 %v835, 7
    %v837 = vsub.s32 0, %v836
    %v838 = vrot.slane %v833, %v837
    %v839 = vmul.f32 %v831, %v838
    %v840 = vmul.f32 %v832, %v838
    %841 = vadd.xlane.f32.xlu0 %v839
    %v842 = vpop.xlane.xlu0 %841
    %843 = vadd.xlane.f32.xlu0 %v840
    %v844 = vpop.xlane.xlu0 %843
    %v845 = vlaneseq
    %v846 = vshrl.u32 %v845, 7
    %v847 = vsub.s32 0, %v846
    %v848 = vrot.slane %v834, %v847
    %v849 = vadd.f32 %v842, %v848
    %v850 = vadd.f32 %v844, %v848
    %v851 = vlaneseq
    %v852 = vand.u32 %v851, 127
    %vm853 = vcmp.eq.s32.totalorder %v852, 32
    %855 = vset.pattern.permute.xlu0 0
    %856 = vperm.xlu0 %855, %v849
    %v857 = vpop.permute.xlu0 %856
    %860 = vset.pattern.permute.xlu0 0
    %861 = vperm.xlu0 %860, %v850
    %v862 = vpop.permute.xlu0 %861
    %v864 = vsel %vm853, %v857, %v603
    %v865 = vsel %vm853, %v862, %v604
    %866 = vst [vmem:[#allocation8] sm:$0xff] %v864
    %867 = vst [vmem:[#allocation8 + $0x8] sm:$0xff] %v865
    // Predicated region
    $region34: #{tpu_custom_call.1} parent=1 // pred_check
      _
    $region35: #{tpu_custom_call.1} parent=1 // pred_check_branch
      %869 = sbr.rel (0) target = $region37
    $region36: #{tpu_custom_call.1} parent=1 // pred_region
      %s871 = ssub.s32 256, 256
      %872 = vsyncadd [#allocation4], %s871
      %s873 = sshll.u32 [#allocation8], 4
      %s874 = int_to_ptr.vmem [resolvable:$true] %s873
      %879 = dma.vmem_to_hbm [thread:$0]  %s874, 256, %s5, [#allocation4], 128, 128, 8
    $region37: #{tpu_custom_call.1} parent=1 // pred_fallthru
      _
    // Predicated region
    $region38: #{tpu_custom_call.1} parent=1 // pred_check
      _
    $region39: #{tpu_custom_call.1} parent=1 // pred_check_branch
      %881 = sbr.rel (0) target = $region41
    $region40: #{tpu_custom_call.1} parent=1 // pred_region
      %882 = dma.done [#allocation4], 256
    $region41: #{tpu_custom_call.1} parent=1 // pred_fallthru
      _
    %883 = vsyncpa [#allocation3], 1
    %884 = vsyncpa [#allocation6], 1
    %885 = vsyncpa [#allocation4], 1

</llo_original>
